<compile_context>
chip_gen: v6e
topology: v6e:2x2x1
jax: 0.10.0
libtpu: 0.0.40
codegen_flags: <defaults>
</compile_context>

<pallas_src>
import numpy as np
import jax
import jax.numpy as jnp
from jax import lax
from jax.experimental import pallas as pl
from jax.experimental.pallas import tpu as pltpu


# --------------------------- chip / budget helpers -----------------------------

def _chip_info():
    """Returns (vmem_capacity_bytes, is_v5) with conservative fallbacks."""
    vmem = None
    try:
        vmem = int(pltpu.get_tpu_info().vmem_capacity_bytes)
    except Exception:
        vmem = None
    kind = ""
    try:
        kind = str(jax.devices()[0].device_kind).lower()
    except Exception:
        kind = ""
    if vmem is None:
        if "v7" in kind:
            vmem = 64 * 1024 * 1024
        elif "v5" in kind or "v6" in kind:
            vmem = 128 * 1024 * 1024
        else:
            vmem = 64 * 1024 * 1024          # conservative default
    return vmem, ("v5" in kind)


def _vmem_limit(est_bytes, cap_bytes):
    return int(min(max(est_bytes + (8 << 20), 32 << 20), cap_bytes))


def _dft_tables_np(n):
    k = np.arange(n, dtype=np.float64)
    ang = 2.0 * np.pi * np.outer(k, k) / n
    return np.cos(ang), np.sin(ang)


# Cached probe: does this JAX accept pl.BlockSpec(pipeline_mode=pl.Buffered(1))?
_SINGLE_BUF_OK = None


def _run_builder(build):
    """Run build(single_buffer), preferring single-buffered constant tables,
    with a cached fallback to default double-buffering for older JAX."""
    global _SINGLE_BUF_OK
    if _SINGLE_BUF_OK is None:
        try:
            out = build(True)
            jax.block_until_ready(out)
            _SINGLE_BUF_OK = True
            return out
        except Exception:
            _SINGLE_BUF_OK = False
    if _SINGLE_BUF_OK:
        try:
            return build(True)
        except Exception:
            pass
    return build(False)


# ---------------- small-transform path: single Kronecker matmul ----------------

def _fft2_real_kron_kernel(x_ref, k_ref, o_ref):
    # x_ref: (TB, SH), k_ref: (SH, TN), o_ref: (TB, TN)
    x = x_ref[...].astype(k_ref.dtype)            # in-VMEM cast, no extra HBM traffic
    o_ref[...] = jnp.dot(x, k_ref[...],
                         preferred_element_type=jnp.float32).astype(o_ref.dtype)


# ---------------- general path: batch-blocked factored matmuls -----------------

def _fft2_real_block_kernel(x_ref, cos_h_ref, sin_h_ref, cs2_ref, o_ref, t_ref):
    # x_ref:    (TB, S, H) input batch block
    # cos_h_ref/sin_h_ref: (H, H) lane-stage DFT tables
    # cs2_ref:  (S, 2S) = [C_S | -S_S] fused sublane-stage operator
    # o_ref:    (TB, S, H) real(FFT2) output block
    # t_ref:    (TB, 2S, H) VMEM scratch holding [X@C_H ; X@S_H] per batch
    tb, s, h = x_ref.shape
    cdt = cs2_ref.dtype
    x2d = x_ref[...].reshape(tb * s, h).astype(cdt)
    # H stage: two big lane-contraction matmuls over the whole batch block
    # (separate cos/sin outputs avoid lane-axis slicing at non-128 offsets).
    tc = jnp.dot(x2d, cos_h_ref[...], preferred_element_type=jnp.float32)
    ts = jnp.dot(x2d, sin_h_ref[...], preferred_element_type=jnp.float32)
    t_ref[:, :s, :] = tc.reshape(tb, s, h).astype(cdt)
    t_ref[:, s:, :] = ts.reshape(tb, s, h).astype(cdt)
    # S stage: ONE fused batched contraction over K=2S (no per-batch unrolled
    # pair of matmuls, no VPU subtract): out[b] = [C_S | -S_S] @ [tc_b ; ts_b].
    cs2b = jnp.broadcast_to(cs2_ref[...], (tb, s, 2 * s))
    out = lax.dot_general(cs2b, t_ref[...],
                          dimension_numbers=(((2,), (1,)), ((0,), (0,))),
                          preferred_element_type=jnp.float32)
    o_ref[...] = out.astype(o_ref.dtype)


# ------------------------------- wrapper ---------------------------------------

def fourier_transform_2d(x, use_bf16=False):
    """Equivalent of torch.fft.fft2(x, dim=(-2, -1)).real for real x of shape (B, S, H).

    use_bf16=True halves DFT-table / operand MXU+DMA cost (accumulation stays
    f32) at the price of ~1e-2 relative error; default keeps f32 operands to
    match the reference numerics.
    """
    B, S, H = x.shape
    SH = S * H
    vmem_cap, is_v5 = _chip_info()
    limit_cap = max(32 << 20, min((3 * vmem_cap) // 4, vmem_cap - (12 << 20)))
    budget = min((vmem_cap * 7) // 10, limit_cap - (8 << 20))

    table_dtype = jnp.bfloat16 if use_bf16 else jnp.float32
    tbytes = jnp.dtype(table_dtype).itemsize
    xbytes = x.dtype.itemsize
    cos_s_np, sin_s_np = _dft_tables_np(S)
    cos_h_np, sin_h_np = _dft_tables_np(H)

    # v5e's 197 TF/s MXU makes the redundant Kronecker FLOPs compute-bound sooner.
    kron_max_sh = 512 if is_v5 else 1024

    if SH <= kron_max_sh:
        # K[j*H+k, m*H+n] = cos_S[j,m]cos_H[k,n] - sin_S[j,m]sin_H[k,n]  (symmetric)
        kron_np = np.kron(cos_s_np, cos_h_np) - np.kron(sin_s_np, sin_h_np)
        kron_tbl = jnp.asarray(kron_np, table_dtype)
        x2d = x.reshape(B, SH)

        def build(single_buffer):
            kfac = 1 if single_buffer else 2
            per_row = SH * (2 * xbytes + 3 * 4)          # x (2-buf) + out (2-buf) + acc
            tb_mem = max(1, (budget - kfac * SH * SH * tbytes) // per_row)
            TB = int(min(B, 1024, tb_mem))
            if TB >= 8:
                TB = (TB // 8) * 8                        # keep second-to-last dim 8-aligned
            else:
                TB = B                                    # full batch (== array dim is legal)
            nb = pl.cdiv(B, TB)
            if nb == 1 and B > 8:
                TB = 8 * max(1, pl.cdiv(B, 2) // 8)       # >=2 batch steps for megacore
                nb = pl.cdiv(B, TB)
            TN = SH
            if nb == 1 and SH % 256 == 0:
                TN = SH // 2                              # column split keeps both v7x TCs busy
            grid = (pl.cdiv(B, TB), SH // TN)

            k_kwargs = {}
            if single_buffer and TN == SH:
                k_kwargs["pipeline_mode"] = pl.Buffered(1)   # constant table: no 2x VMEM
            k_est = (1 if (single_buffer and TN == SH) else 2) * SH * TN * tbytes
            est = 2 * TB * SH * xbytes + k_est + 3 * TB * TN * 4
            cost = pl.CostEstimate(flops=2 * B * SH * SH, transcendentals=0,
                                   bytes_accessed=B * SH * (xbytes + 4) + SH * SH * tbytes)
            out2d = pl.pallas_call(
                _fft2_real_kron_kernel,
                out_shape=jax.ShapeDtypeStruct((B, SH), jnp.float32),
                grid=grid,
                in_specs=[
                    pl.BlockSpec((TB, SH), lambda i, j: (i, 0)),
                    pl.BlockSpec((SH, TN), lambda i, j: (0, j), **k_kwargs),
                ],
                out_specs=pl.BlockSpec((TB, TN), lambda i, j: (i, j)),
                compiler_params=pltpu.CompilerParams(
                    dimension_semantics=("parallel", "parallel"),
                    vmem_limit_bytes=_vmem_limit(est, limit_cap)),
                cost_estimate=cost,
            )(x2d, kron_tbl)
            return out2d.reshape(B, S, H)

        return _run_builder(build)

    # ---- factored path: resident DFT tables, batch-blocked, fused stages ----
    cos_h = jnp.asarray(cos_h_np, table_dtype)                           # (H, H)
    sin_h = jnp.asarray(sin_h_np, table_dtype)                           # (H, H)
    cs2 = jnp.asarray(np.concatenate([cos_s_np, -sin_s_np], axis=1), table_dtype)  # (S, 2S)
    cbytes = tbytes

    def build(single_buffer):
        tfac = 1 if single_buffer else 2
        table_bytes = tfac * (2 * H * H + 2 * S * S) * tbytes
        per_b = (S * H * (2 * xbytes + 2 * 4)       # x + out blocks, double-buffered
                 + 2 * S * H * cbytes               # (TB,2S,H) scratch
                 + 3 * S * H * 4                    # matmul temps / headroom
                 + 2 * S * S * cbytes)              # broadcast cs2 slice
        tb_rows = max(1, 1024 // S)                 # target ~1024 MXU rows on the H stage
        tb_mem = max(1, (budget - table_bytes) // per_b)
        TB = int(max(1, min(B, tb_rows, tb_mem)))
        if B >= 2:
            TB = min(TB, pl.cdiv(B, 2))             # >=2 grid steps so both v7x TCs get work
        grid = (pl.cdiv(B, TB),)

        spec_kwargs = dict(pipeline_mode=pl.Buffered(1)) if single_buffer else {}
        est = table_bytes + TB * per_b
        cost = pl.CostEstimate(
            flops=4 * B * S * H * (S + H), transcendentals=0,
            bytes_accessed=B * S * H * (xbytes + 4) + (2 * H * H + 2 * S * S) * tbytes)
        # TODO(synk): for very large S/H (resident cos/sin tables exceeding the VMEM
        # budget, e.g. H>=2048 on v7x) add a K-tiled reduction grid axis with a VMEM
        # accumulator instead of keeping the tables fully resident.
        return pl.pallas_call(
            _fft2_real_block_kernel,
            out_shape=jax.ShapeDtypeStruct((B, S, H), jnp.float32),
            grid=grid,
            in_specs=[
                pl.BlockSpec((TB, S, H), lambda i: (i, 0, 0)),
                pl.BlockSpec((H, H), lambda i: (0, 0), **spec_kwargs),
                pl.BlockSpec((H, H), lambda i: (0, 0), **spec_kwargs),
                pl.BlockSpec((S, 2 * S), lambda i: (0, 0), **spec_kwargs),
            ],
            out_specs=pl.BlockSpec((TB, S, H), lambda i: (i, 0, 0)),
            scratch_shapes=[pltpu.VMEM((TB, 2 * S, H), table_dtype)],
            compiler_params=pltpu.CompilerParams(
                dimension_semantics=("parallel",),
                vmem_limit_bytes=_vmem_limit(est, limit_cap)),
            cost_estimate=cost,
        )(x, cos_h, sin_h, cs2)

    return _run_builder(build)


if __name__ == "__main__":
    key = jax.random.PRNGKey(0)
    k1, k2 = jax.random.split(key)

    # Small FNet-style shape: batch=2, seq=8, hidden=32 -> Kronecker single-matmul path.
    x = jax.random.normal(k1, (2, 8, 32), dtype=jnp.float32)
    out = fourier_transform_2d(x)
    jax.block_until_ready(out)
    ref = jnp.fft.fft2(x, axes=(-2, -1)).real
    err = float(jnp.max(jnp.abs(out - ref)) / (jnp.max(jnp.abs(ref)) + 1e-6))
    assert err < 1e-2, f"kronecker path mismatch: rel err {err}"

    # Slightly larger shape to exercise the batch-blocked factored path.
    x2 = jax.random.normal(k2, (4, 16, 128), dtype=jnp.float32)
    out2 = fourier_transform_2d(x2)
    jax.block_until_ready(out2)
    ref2 = jnp.fft.fft2(x2, axes=(-2, -1)).real
    err2 = float(jnp.max(jnp.abs(out2 - ref2)) / (jnp.max(jnp.abs(ref2)) + 1e-6))
    assert err2 < 1e-2, f"factored path mismatch: rel err {err2}"

    print("KERNEL_OK")
</pallas_src>

<mosaic_0001>
module attributes {stable_mosaic.version = 11 : i64} {
  func.func @_fft2_real_kron_kernel(%arg0: i32, %arg1: i32, %arg2: memref<2x256xf32, #tpu.memory_space<vmem>>, %arg3: memref<256x128xf32, #tpu.memory_space<vmem>>, %arg4: memref<2x128xf32, #tpu.memory_space<vmem>>) attributes {dimension_semantics = [#tpu.dimension_semantics<parallel>, #tpu.dimension_semantics<parallel>], iteration_bounds = array<i64: 1, 2>, scalar_prefetch = 0 : i64, scratch_operands = 0 : i64, tpu.core_type = #tpu.core_type<tc>, window_params = [{transform_indices = @transform_0, window_bounds = array<i64: 2, 256>}, {transform_indices = @transform_1, window_bounds = array<i64: 256, 128>}, {transform_indices = @transform_2, window_bounds = array<i64: 2, 128>}]} {
    %c0 = arith.constant 0 : index
    %c0_0 = arith.constant 0 : index
    %0 = vector.load %arg2[%c0, %c0_0] : memref<2x256xf32, #tpu.memory_space<vmem>>, vector<2x256xf32>
    %c0_1 = arith.constant 0 : index
    %c0_2 = arith.constant 0 : index
    %1 = vector.load %arg3[%c0_1, %c0_2] : memref<256x128xf32, #tpu.memory_space<vmem>>, vector<256x128xf32>
    %cst = arith.constant dense<0.000000e+00> : vector<2x128xf32>
    %2 = tpu.matmul %0, %1, %cst {dimension_numbers = #tpu.dot_dimension_numbers<[1], [0], [0], [1], [0, 0, 1, 1], [], []>} : vector<2x256xf32>, vector<256x128xf32>, vector<2x128xf32> -> vector<2x128xf32>
    %c0_3 = arith.constant 0 : index
    %c0_4 = arith.constant 0 : index
    %3 = vector.load %arg4[%c0_3, %c0_4] : memref<2x128xf32, #tpu.memory_space<vmem>>, vector<2x128xf32>
    tpu.vector_store %arg4[%c0_3, %c0_4], %2 {strides = array<i32>} : memref<2x128xf32, #tpu.memory_space<vmem>>, vector<2x128xf32>,
    return
  }
  func.func @transform_0(%arg0: i32, %arg1: i32) -> (i32, i32) {
    %c0_i32 = arith.constant 0 : i32
    %c0_i32_0 = arith.constant 0 : i32
    return %arg0, %c0_i32 : i32, i32
  }
  func.func @transform_1(%arg0: i32, %arg1: i32) -> (i32, i32) {
    %c0_i32 = arith.constant 0 : i32
    %c0_i32_0 = arith.constant 0 : i32
    return %c0_i32, %arg1 : i32, i32
  }
  func.func @transform_2(%arg0: i32, %arg1: i32) -> (i32, i32) {
    %c0_i32 = arith.constant 0 : i32
    return %arg0, %arg1 : i32, i32
  }
}

module attributes {stable_mosaic.version = 11 : i64} {
  func.func @_fft2_real_kron_kernel(%arg0: i32, %arg1: i32, %arg2: memref<2x256xf32, #tpu.memory_space<vmem>>, %arg3: memref<256x128xf32, #tpu.memory_space<vmem>>, %arg4: memref<2x128xf32, #tpu.memory_space<vmem>>) attributes {dimension_semantics = [#tpu.dimension_semantics<parallel>, #tpu.dimension_semantics<parallel>], iteration_bounds = array<i64: 1, 2>, scalar_prefetch = 0 : i64, scratch_operands = 0 : i64, tpu.core_type = #tpu.core_type<tc>, window_params = [{transform_indices = @transform_0, window_bounds = array<i64: 2, 256>}, {transform_indices = @transform_1, window_bounds = array<i64: 256, 128>}, {transform_indices = @transform_2, window_bounds = array<i64: 2, 128>}]} {
    %c0 = arith.constant 0 : index
    %c0_0 = arith.constant 0 : index
    %0 = vector.load %arg2[%c0, %c0_0] : memref<2x256xf32, #tpu.memory_space<vmem>>, vector<2x256xf32>
    %c0_1 = arith.constant 0 : index
    %c0_2 = arith.constant 0 : index
    %1 = vector.load %arg3[%c0_1, %c0_2] : memref<256x128xf32, #tpu.memory_space<vmem>>, vector<256x128xf32>
    %cst = arith.constant dense<0.000000e+00> : vector<2x128xf32>
    %2 = tpu.matmul %0, %1, %cst {dimension_numbers = #tpu.dot_dimension_numbers<[1], [0], [0], [1], [0, 0, 1, 1], [], []>} : vector<2x256xf32>, vector<256x128xf32>, vector<2x128xf32> -> vector<2x128xf32>
    %c0_3 = arith.constant 0 : index
    %c0_4 = arith.constant 0 : index
    %3 = vector.load %arg4[%c0_3, %c0_4] : memref<2x128xf32, #tpu.memory_space<vmem>>, vector<2x128xf32>
    tpu.vector_store %arg4[%c0_3, %c0_4], %2 {strides = array<i32>} : memref<2x128xf32, #tpu.memory_space<vmem>>, vector<2x128xf32>,
    return
  }
  func.func @transform_0(%arg0: i32, %arg1: i32) -> (i32, i32) {
    %c0_i32 = arith.constant 0 : i32
    %c0_i32_0 = arith.constant 0 : i32
    return %arg0, %c0_i32 : i32, i32
  }
  func.func @transform_1(%arg0: i32, %arg1: i32) -> (i32, i32) {
    %c0_i32 = arith.constant 0 : i32
    %c0_i32_0 = arith.constant 0 : i32
    return %c0_i32, %arg1 : i32, i32
  }
  func.func @transform_2(%arg0: i32, %arg1: i32) -> (i32, i32) {
    %c0_i32 = arith.constant 0 : i32
    return %arg0, %arg1 : i32, i32
  }
}

</mosaic_0001>

<llo_original>
// kernel: tpu_custom_call.1
$region0: #{tpu_custom_call.1}
  #allocation0 [shape = 'u32[]', space=smem, size = 0x4, offset = 0x4, fixed_abs, tag = 'smem constant byte address 0x4 - core index']
  #allocation1 [shape = 'u32[144,128]{1,0:T(1,128)}', space=vmem, size = 0x12000, scoped, tag = 'internal scratch']
  %s0 = inlined_call_operand.hbm [shape: f32[2,256], index: 0, kind: input, shape index: {}]
  %s1 = inlined_call_operand.hbm [shape: f32[256,256], index: 1, kind: input, shape index: {}]
  %s2 = inlined_call_operand.hbm [shape: f32[2,256], index: 2, kind: output, shape index: {}]
  %s3 = sld [smem:[#allocation0]]
  $region49: #{tpu_custom_call.1} parent=0
    _
  %s5 = ssub.s32 1, %s3
  %s6 = scalar_select 0, %s5, %s3
  $region1: #{tpu_custom_call.1} parent=0
    #allocation2 [shape = 'u8[2048]{0}', space=vmem, size = 0x800, scoped, tag = 'input window, operand 0, single buffered']
    #allocation3 [shape = 's32[2]{0}', space=sflag, size = 0x8, scoped, tag = 'scoped memory for tpu_custom_call.1']
    #allocation4 [shape = 's32[2]{0}', space=sflag, size = 0x8, scoped, tag = 'scoped memory for tpu_custom_call.1']
    #allocation5 [shape = 'u8[262144]{0}', space=vmem, size = 0x40000, scoped, tag = 'input window, operand 1']
    #allocation6 [shape = 's32[2]{0}', space=sflag, size = 0x8, scoped, tag = 'scoped memory for tpu_custom_call.1']
    #allocation7 [shape = 'u8[2048]{0}', space=vmem, size = 0x800, scoped, tag = 'output window, operand 0']
    %7 = vsyncpa [#allocation3], 0
    %8 = vsyncpa [#allocation6], 0
    %s9 = scalar_lea.sflag [#allocation6], 1
    %10 = vsyncpa %s9, 0
    %11 = vsyncpa [#allocation4], 0
    %s12 = scalar_lea.sflag [#allocation4], 1
    %13 = vsyncpa %s12, 0
    loop: start=0, step=1, limit=4
    $region2: #{tpu_custom_call.1} parent=1 // loop_pre_header
      _
    $region3: #{tpu_custom_call.1} parent=1 // loop_header
      %s15 = sphi 0, %s19
      %p16 = scmp.ge.s32.totalorder %s15, 4
      %s22 = sphi 0, %s34
      %s23 = sphi 0, %s30
      %s24 = sphi 0, %s22
      %s25 = sphi 0, %s23
      %s26 = sphi 0, %s24
      %s27 = sphi 0, %s25
      %s37 = sphi 0, %s39
      %s40 = sphi 0, %s37
      %s41 = sphi 0, %s40
      %s57 = sphi 0, %s41
      %s63 = sphi 0, %s65
      %s66 = sphi 0, %s63
      %s67 = sphi 0, %s66
      %s83 = sphi 0, %s67
      %s91 = sphi 0, %s93
      %s94 = sphi 0, %s91
      %s95 = sphi 0, %s94
      %s111 = sphi 0, %s95
    $region4: #{tpu_custom_call.1} parent=1 // loop_header_branch
      %18 = sbr.rel (%p16) target = $region8
    $region5: #{tpu_custom_call.1} parent=1 // loop_body
      %s20 = ssub.s32 %s15, 1
      %s21 = ssub.s32 %s15, 2
      %s28 = sadd.s32 1, %s23
      %p29 = scmp.ge.s32.totalorder %s28, 2
      %s30 = scalar_select %p29, 0, %s28
      %s31 = sadd.s32 1, %s22
      %s32 = scalar_select %p29, %s31, %s22
      %p33 = scmp.ge.s32.totalorder %s32, 1
      %s34 = scalar_select %p33, 0, %s32
      %s35 = ssub.s32 %s22, %s34
      %p36 = scmp.eq.s32.totalorder %s35, 0
      %s38 = sadd.s32 %s37, 1
      %s39 = scalar_select %p36, %s37, %s38
      %p42 = pneg %p36
      %p43 = scmp.eq.s32.totalorder %s15, 1
      %p44 = por %p42, %p43
      %p45 = scmp.ne.s32.totalorder %s37, %s40
      %p46 = scmp.eq.s32.totalorder %s15, 0
      %p47 = por %p45, %p46
      %p48 = scmp.ne.s32.totalorder %s37, %s40
      %p49 = scmp.eq.s32.totalorder %s20, 1
      %p50 = por %p48, %p49
      %p51 = scmp.ne.s32.totalorder %s40, %s41
      %p52 = scmp.eq.s32.totalorder %s20, 0
      %p53 = por %p51, %p52
      %p54 = scmp.ne.s32.totalorder %s40, %s41
      %p55 = scmp.eq.s32.totalorder %s21, 1
      %p56 = por %p54, %p55
      %p58 = scmp.ne.s32.totalorder %s41, %s57
      %p59 = scmp.eq.s32.totalorder %s21, 0
      %p60 = por %p58, %p59
      %s61 = ssub.s32 %s23, %s30
      %p62 = scmp.eq.s32.totalorder %s61, 0
      %s64 = sadd.s32 %s63, 1
      %s65 = scalar_select %p62, %s63, %s64
      %p68 = pneg %p62
      %p69 = scmp.eq.s32.totalorder %s15, 1
      %p70 = por %p68, %p69
      %p71 = scmp.ne.s32.totalorder %s63, %s66
      %p72 = scmp.eq.s32.totalorder %s15, 0
      %p73 = por %p71, %p72
      %p74 = scmp.ne.s32.totalorder %s63, %s66
      %p75 = scmp.eq.s32.totalorder %s20, 1
      %p76 = por %p74, %p75
      %p77 = scmp.ne.s32.totalorder %s66, %s67
      %p78 = scmp.eq.s32.totalorder %s20, 0
      %p79 = por %p77, %p78
      %p80 = scmp.ne.s32.totalorder %s66, %s67
      %p81 = scmp.eq.s32.totalorder %s21, 1
      %p82 = por %p80, %p81
      %p84 = scmp.ne.s32.totalorder %s67, %s83
      %p85 = scmp.eq.s32.totalorder %s21, 0
      %p86 = por %p84, %p85
      %s87 = ssub.s32 %s22, %s34
      %s88 = ssub.s32 %s23, %s30
      %s89 = sor.u32 %s87, %s88
      %p90 = scmp.eq.s32.totalorder %s89, 0
      %s92 = sadd.s32 %s91, 1
      %s93 = scalar_select %p90, %s91, %s92
      %p96 = pneg %p90
      %p97 = scmp.eq.s32.totalorder %s15, 1
      %p98 = por %p96, %p97
      %p99 = scmp.ne.s32.totalorder %s91, %s94
      %p100 = scmp.eq.s32.totalorder %s15, 0
      %p101 = por %p99, %p100
      %p102 = scmp.ne.s32.totalorder %s91, %s94
      %p103 = scmp.eq.s32.totalorder %s20, 1
      %p104 = por %p102, %p103
      %p105 = scmp.ne.s32.totalorder %s94, %s95
      %p106 = scmp.eq.s32.totalorder %s20, 0
      %p107 = por %p105, %p106
      %p108 = scmp.ne.s32.totalorder %s94, %s95
      %p109 = scmp.eq.s32.totalorder %s21, 1
      %p110 = por %p108, %p109
      %p112 = scmp.ne.s32.totalorder %s95, %s111
      %p113 = scmp.eq.s32.totalorder %s21, 0
      %p114 = por %p112, %p113
      %p115 = scmp.le.s32.totalorder 1, %s15
      %p116 = scmp.lt.s32.totalorder %s15, 3
      %p117 = pnand %p115, %p116
      %p118 = pneg %p117
      // Predicated region
      $region9: #{tpu_custom_call.1} parent=5 // pred_check
        _
      $region10: #{tpu_custom_call.1} parent=5 // pred_check_branch
        %120 = sbr.rel (%p117) target = $region12
      $region11: #{tpu_custom_call.1} parent=5 // pred_region
        %s121 = ssub.s32 %s15, 1
        // Predicated region
        $region13: #{tpu_custom_call.1} parent=11 // pred_check
          %p122 = pneg %p53
        $region14: #{tpu_custom_call.1} parent=11 // pred_check_branch
          %124 = sbr.rel (%p122) target = $region16
        $region15: #{tpu_custom_call.1} parent=11 // pred_region
          %s126 = ssub.s32 64, 64
          %127 = vsyncadd [#allocation3], %s126
          %s128 = smul.addr %s24, 2
          %s129 = smul.addr %s128, 32
          %s130 = scalar_lea.hbm %s0, %s129
          %s132 = sshll.u32 [#allocation2], 4
          %s133 = int_to_ptr.vmem [resolvable:$true] %s132
          %135 = dma.hbm_to_vmem [thread:$0]  %s130, 64, %s133, [#allocation3]
        $region16: #{tpu_custom_call.1} parent=11 // pred_fallthru
          _
      $region12: #{tpu_custom_call.1} parent=5 // pred_fallthru
        _
      %p136 = scmp.lt.s32.totalorder %s15, 2
      // Predicated region
      $region17: #{tpu_custom_call.1} parent=5 // pred_check
        %p137 = pneg %p136
      $region18: #{tpu_custom_call.1} parent=5 // pred_check_branch
        %139 = sbr.rel (%p137) target = $region20
      $region19: #{tpu_custom_call.1} parent=5 // pred_region
        // Predicated region
        $region21: #{tpu_custom_call.1} parent=19 // pred_check
          %p140 = pneg %p73
        $region22: #{tpu_custom_call.1} parent=19 // pred_check_branch
          %142 = sbr.rel (%p140) target = $region24
        $region23: #{tpu_custom_call.1} parent=19 // pred_region
          %s143 = sand.u32 %s63, 1
          %s144 = scalar_lea.sflag [#allocation6], %s143
          %s145 = sand.u32 %s63, 1
          %s146 = smul.addr %s145, 256
          %s147 = scalar_lea.vmem [#allocation5], %s146
          %s149 = ssub.s32 4096, 4096
          %150 = vsyncadd %s144, %s149
          %s151 = smul.addr %s23, 128
          %s152 = scalar_lea.hbm %s1, %s151
          %s153 = sshll.u32 %s147, 4
          %s154 = int_to_ptr.vmem [resolvable:$true] %s153
          %159 = dma.hbm_to_vmem [thread:$0]  %s152, 4096, %s154, %s144, 256, 128, 8
        $region24: #{tpu_custom_call.1} parent=19 // pred_fallthru
          _
      $region20: #{tpu_custom_call.1} parent=5 // pred_fallthru
        _
      %p160 = scmp.le.s32.totalorder 1, %s15
      %p161 = scmp.lt.s32.totalorder %s15, 3
      %p162 = pnand %p160, %p161
      %p163 = pneg %p162
      // Predicated region
      $region25: #{tpu_custom_call.1} parent=5 // pred_check
        _
      $region26: #{tpu_custom_call.1} parent=5 // pred_check_branch
        %165 = sbr.rel (%p162) target = $region28
      $region27: #{tpu_custom_call.1} parent=5 // pred_region
        %s166 = ssub.s32 %s15, 1
        // Predicated region
        $region29: #{tpu_custom_call.1} parent=27 // pred_check
          %p167 = pneg %p53
        $region30: #{tpu_custom_call.1} parent=27 // pred_check_branch
          %169 = sbr.rel (%p167) target = $region32
        $region31: #{tpu_custom_call.1} parent=27 // pred_region
          %170 = dma.done [#allocation3], 64
        $region32: #{tpu_custom_call.1} parent=27 // pred_fallthru
          _
        %s171 = sand.u32 %s66, 1
        %s172 = scalar_lea.sflag [#allocation6], %s171
        %s173 = sand.u32 %s66, 1
        %s174 = smul.addr %s173, 256
        %s175 = scalar_lea.vmem [#allocation5], %s174
        // Predicated region
        $region33: #{tpu_custom_call.1} parent=27 // pred_check
          %p176 = pneg %p79
        $region34: #{tpu_custom_call.1} parent=27 // pred_check_branch
          %178 = sbr.rel (%p176) target = $region36
        $region35: #{tpu_custom_call.1} parent=27 // pred_region
          %179 = dma.done %s172, 4096
        $region36: #{tpu_custom_call.1} parent=27 // pred_fallthru
          _
        %p180 = pneg %p53
        %p181 = pneg %p50
        %s182 = sand.u32 %s66, 1
        %s183 = scalar_lea.sflag [#allocation6], %s182
        %s184 = sand.u32 %s66, 1
        %s185 = smul.addr %s184, 256
        %s186 = scalar_lea.vmem [#allocation5], %s185
        %p187 = pneg %p79
        %p188 = pneg %p76
        %p189 = pneg %p107
        %p190 = pneg %p104
        %s191 = sand.u32 %s94, 1
        %s192 = scalar_lea.sflag [#allocation4], %s191
        %s193 = sand.u32 %s94, 1
        %s194 = smul.addr %s193, 2
        %s195 = scalar_lea.vmem [#allocation7], %s194
        %v196 = vld [vmem:[#allocation2] sm:$0xf]
        %v197 = vld [vmem:[%s175] sm:$0xff]
        %v198 = vld [vmem:[%s175 + $0x8] sm:$0xff]
        %v199 = vld [vmem:[%s175 + $0x10] sm:$0xff]
        %v200 = vld [vmem:[%s175 + $0x18] sm:$0xff]
        %v201 = vld [vmem:[%s175 + $0x20] sm:$0xff]
        %v202 = vld [vmem:[%s175 + $0x28] sm:$0xff]
        %v203 = vld [vmem:[%s175 + $0x30] sm:$0xff]
        %v204 = vld [vmem:[%s175 + $0x38] sm:$0xff]
        %v205 = vld [vmem:[%s175 + $0x40] sm:$0xff]
        %v206 = vld [vmem:[%s175 + $0x48] sm:$0xff]
        %v207 = vld [vmem:[%s175 + $0x50] sm:$0xff]
        %v208 = vld [vmem:[%s175 + $0x58] sm:$0xff]
        %v209 = vld [vmem:[%s175 + $0x60] sm:$0xff]
        %v210 = vld [vmem:[%s175 + $0x68] sm:$0xff]
        %v211 = vld [vmem:[%s175 + $0x70] sm:$0xff]
        %v212 = vld [vmem:[%s175 + $0x78] sm:$0xff]
        %v213 = vld [vmem:[%s175 + $0x80] sm:$0xff]
        %v214 = vld [vmem:[%s175 + $0x88] sm:$0xff]
        %v215 = vld [vmem:[%s175 + $0x90] sm:$0xff]
        %v216 = vld [vmem:[%s175 + $0x98] sm:$0xff]
        %v217 = vld [vmem:[%s175 + $0xa0] sm:$0xff]
        %v218 = vld [vmem:[%s175 + $0xa8] sm:$0xff]
        %v219 = vld [vmem:[%s175 + $0xb0] sm:$0xff]
        %v220 = vld [vmem:[%s175 + $0xb8] sm:$0xff]
        %v221 = vld [vmem:[%s175 + $0xc0] sm:$0xff]
        %v222 = vld [vmem:[%s175 + $0xc8] sm:$0xff]
        %v223 = vld [vmem:[%s175 + $0xd0] sm:$0xff]
        %v224 = vld [vmem:[%s175 + $0xd8] sm:$0xff]
        %v225 = vld [vmem:[%s175 + $0xe0] sm:$0xff]
        %v226 = vld [vmem:[%s175 + $0xe8] sm:$0xff]
        %v227 = vld [vmem:[%s175 + $0xf0] sm:$0xff]
        %v228 = vld [vmem:[%s175 + $0xf8] sm:$0xff]
        %v231 = vunpack.c.l.s4 1983009808
        %v232 = vunpack.c.0.s8 %v231
        %v233 = vlaneseq
        %v234 = vshrl.u32 %v233, 7
        %v235 = vsub.s32 %v232, %v234
        %v236 = vrot.slane %v196, %v235
        %v237 = vcombine.high %v236, %v236
        %240 = vmatprep.subr.mxu0 0.0
        %241 = vmatpush1.msra.mxu0 %v212
        %242 = vmatprep.subr.mxu0 0.0
        %243 = vmatpush1.msra.mxu0 %v211
        %244 = vmatprep.subr.mxu0 0.0
        %245 = vmatpush1.msra.mxu0 %v210
        %246 = vmatprep.subr.mxu0 0.0
        %247 = vmatpush1.msra.mxu0 %v209
        %248 = vmatprep.subr.mxu0 0.0
        %249 = vmatpush1.msra.mxu0 %v208
        %250 = vmatprep.subr.mxu0 0.0
        %251 = vmatpush1.msra.mxu0 %v207
        %252 = vmatprep.subr.mxu0 0.0
        %253 = vmatpush1.msra.mxu0 %v206
        %254 = vmatprep.subr.mxu0 0.0
        %255 = vmatpush1.msra.mxu0 %v205
        %256 = vmatprep.subr.mxu0 0.0
        %257 = vmatpush1.msra.mxu0 %v204
        %258 = vmatprep.subr.mxu0 0.0
        %259 = vmatpush1.msra.mxu0 %v203
        %260 = vmatprep.subr.mxu0 0.0
        %261 = vmatpush1.msra.mxu0 %v202
        %262 = vmatprep.subr.mxu0 0.0
        %263 = vmatpush1.msra.mxu0 %v201
        %264 = vmatprep.subr.mxu0 0.0
        %265 = vmatpush1.msra.mxu0 %v200
        %266 = vmatprep.subr.mxu0 0.0
        %267 = vmatpush1.msra.mxu0 %v199
        %268 = vmatprep.subr.mxu0 0.0
        %269 = vmatpush1.msra.mxu0 %v198
        %270 = vmatprep.subr.mxu0 0.0
        %271 = vmatpush1.msra.mxu0 %v197
        %272 = vmatprep.subr.mxu0 0.0
        %273 = vmatpush2.msra.mxu0 %v228
        %274 = vmatprep.subr.mxu0 0.0
        %275 = vmatpush2.msra.mxu0 %v227
        %276 = vmatprep.subr.mxu0 0.0
        %277 = vmatpush2.msra.mxu0 %v226
        %278 = vmatprep.subr.mxu0 0.0
        %279 = vmatpush2.msra.mxu0 %v225
        %280 = vmatprep.subr.mxu0 0.0
        %281 = vmatpush2.msra.mxu0 %v224
        %282 = vmatprep.subr.mxu0 0.0
        %283 = vmatpush2.msra.mxu0 %v223
        %284 = vmatprep.subr.mxu0 0.0
        %285 = vmatpush2.msra.mxu0 %v222
        %286 = vmatprep.subr.mxu0 0.0
        %287 = vmatpush2.msra.mxu0 %v221
        %288 = vmatprep.subr.mxu0 0.0
        %289 = vmatpush2.msra.mxu0 %v220
        %290 = vmatprep.subr.mxu0 0.0
        %291 = vmatpush2.msra.mxu0 %v219
        %292 = vmatprep.subr.mxu0 0.0
        %293 = vmatpush2.msra.mxu0 %v218
        %294 = vmatprep.subr.mxu0 0.0
        %295 = vmatpush2.msra.mxu0 %v217
        %296 = vmatprep.subr.mxu0 0.0
        %297 = vmatpush2.msra.mxu0 %v216
        %298 = vmatprep.subr.mxu0 0.0
        %299 = vmatpush2.msra.mxu0 %v215
        %300 = vmatprep.subr.mxu0 0.0
        %301 = vmatpush2.msra.mxu0 %v214
        %302 = vmatprep.subr.mxu0 0.0
        %303 = vmatpush2.msra.mxu0 %v213
        %304 = vmatprep.mubr.f32.mxu0 %v237
        %305 = vmatmul.mubr.f32.gmra.mxu0 %v236
        %v306 = vpop.f32.mrf.mxu0
        %v307 = vadd.f32 0.0, %v306
        %v308 = vpop.f32.mrf.mxu0
        %309 = vdwg.mxu0
        %310 = vst [vmem:[%s195] sm:$0x3] %v307
        %s311 = sand.u32 %s94, 1
        %s312 = scalar_lea.sflag [#allocation4], %s311
        %s313 = sand.u32 %s94, 1
        %s314 = smul.addr %s313, 2
        %s315 = scalar_lea.vmem [#allocation7], %s314
        // Predicated region
        $region37: #{tpu_custom_call.1} parent=27 // pred_check
          %p316 = pneg %p104
        $region38: #{tpu_custom_call.1} parent=27 // pred_check_branch
          %318 = sbr.rel (%p316) target = $region40
        $region39: #{tpu_custom_call.1} parent=27 // pred_region
          %s320 = ssub.s32 32, 32
          %321 = vsyncadd %s312, %s320
          %s322 = smul.addr %s24, 2
          %s323 = sadd.s32 %s25, %s322
          %s324 = smul.addr %s323, 32
          %s325 = scalar_lea.hbm %s2, %s324
          %s327 = sshll.u32 %s315, 4
          %s328 = int_to_ptr.vmem [resolvable:$true] %s327
          %330 = dma.vmem_to_hbm [thread:$0]  %s328, 32, %s325, %s312
        $region40: #{tpu_custom_call.1} parent=27 // pred_fallthru
          _
      $region28: #{tpu_custom_call.1} parent=5 // pred_fallthru
        _
      %p331 = scmp.le.s32.totalorder 2, %s15
      // Predicated region
      $region41: #{tpu_custom_call.1} parent=5 // pred_check
        %p332 = pneg %p331
      $region42: #{tpu_custom_call.1} parent=5 // pred_check_branch
        %334 = sbr.rel (%p332) target = $region44
      $region43: #{tpu_custom_call.1} parent=5 // pred_region
        %s335 = ssub.s32 %s15, 2
        // Predicated region
        $region45: #{tpu_custom_call.1} parent=43 // pred_check
          %p336 = pneg %p110
        $region46: #{tpu_custom_call.1} parent=43 // pred_check_branch
          %338 = sbr.rel (%p336) target = $region48
        $region47: #{tpu_custom_call.1} parent=43 // pred_region
          %s339 = sand.u32 %s95, 1
          %s340 = scalar_lea.sflag [#allocation4], %s339
          %s341 = sand.u32 %s95, 1
          %s342 = smul.addr %s341, 2
          %s343 = scalar_lea.vmem [#allocation7], %s342
          %344 = dma.done %s340, 32
        $region48: #{tpu_custom_call.1} parent=43 // pred_fallthru
          _
      $region44: #{tpu_custom_call.1} parent=5 // pred_fallthru
        _
    $region6: #{tpu_custom_call.1} parent=1 // loop_footer
      %s19 = sadd.s32 1, %s15
    $region7: #{tpu_custom_call.1} parent=1 // loop_footer_branch
      %14 = sbr.rel target = $region3
    $region8: #{tpu_custom_call.1} parent=1 // loop_exit
      _
    %345 = vsyncpa [#allocation3], 1
    %s346 = scalar_lea.sflag [#allocation3], 1
    %347 = vsyncpa %s346, 1
    %348 = vsyncpa [#allocation6], 1
    %s349 = scalar_lea.sflag [#allocation6], 1
    %350 = vsyncpa %s349, 1
    %351 = vsyncpa [#allocation4], 1
    %s352 = scalar_lea.sflag [#allocation4], 1
    %353 = vsyncpa %s352, 1

// kernel: tpu_custom_call.1
$region0: #{tpu_custom_call.1}
  #allocation0 [shape = 'u32[]', space=smem, size = 0x4, offset = 0x4, fixed_abs, tag = 'smem constant byte address 0x4 - core index']
  #allocation1 [shape = 'u32[144,128]{1,0:T(1,128)}', space=vmem, size = 0x12000, scoped, tag = 'internal scratch']
  %s0 = inlined_call_operand.hbm [shape: f32[2,256], index: 0, kind: input, shape index: {}]
  %s1 = inlined_call_operand.hbm [shape: f32[256,256], index: 1, kind: input, shape index: {}]
  %s2 = inlined_call_operand.hbm [shape: f32[2,256], index: 2, kind: output, shape index: {}]
  %s3 = sld [smem:[#allocation0]]
  $region49: #{tpu_custom_call.1} parent=0
    _
  %s5 = ssub.s32 1, %s3
  %s6 = scalar_select 0, %s5, %s3
  $region1: #{tpu_custom_call.1} parent=0
    #allocation2 [shape = 'u8[2048]{0}', space=vmem, size = 0x800, scoped, tag = 'input window, operand 0, single buffered']
    #allocation3 [shape = 's32[2]{0}', space=sflag, size = 0x8, scoped, tag = 'scoped memory for tpu_custom_call.1']
    #allocation4 [shape = 's32[2]{0}', space=sflag, size = 0x8, scoped, tag = 'scoped memory for tpu_custom_call.1']
    #allocation5 [shape = 'u8[262144]{0}', space=vmem, size = 0x40000, scoped, tag = 'input window, operand 1']
    #allocation6 [shape = 's32[2]{0}', space=sflag, size = 0x8, scoped, tag = 'scoped memory for tpu_custom_call.1']
    #allocation7 [shape = 'u8[2048]{0}', space=vmem, size = 0x800, scoped, tag = 'output window, operand 0']
    %7 = vsyncpa [#allocation3], 0
    %8 = vsyncpa [#allocation6], 0
    %s9 = scalar_lea.sflag [#allocation6], 1
    %10 = vsyncpa %s9, 0
    %11 = vsyncpa [#allocation4], 0
    %s12 = scalar_lea.sflag [#allocation4], 1
    %13 = vsyncpa %s12, 0
    loop: start=0, step=1, limit=4
    $region2: #{tpu_custom_call.1} parent=1 // loop_pre_header
      _
    $region3: #{tpu_custom_call.1} parent=1 // loop_header
      %s15 = sphi 0, %s19
      %p16 = scmp.ge.s32.totalorder %s15, 4
      %s22 = sphi 0, %s34
      %s23 = sphi 0, %s30
      %s24 = sphi 0, %s22
      %s25 = sphi 0, %s23
      %s26 = sphi 0, %s24
      %s27 = sphi 0, %s25
      %s37 = sphi 0, %s39
      %s40 = sphi 0, %s37
      %s41 = sphi 0, %s40
      %s57 = sphi 0, %s41
      %s63 = sphi 0, %s65
      %s66 = sphi 0, %s63
      %s67 = sphi 0, %s66
      %s83 = sphi 0, %s67
      %s91 = sphi 0, %s93
      %s94 = sphi 0, %s91
      %s95 = sphi 0, %s94
      %s111 = sphi 0, %s95
    $region4: #{tpu_custom_call.1} parent=1 // loop_header_branch
      %18 = sbr.rel (%p16) target = $region8
    $region5: #{tpu_custom_call.1} parent=1 // loop_body
      %s20 = ssub.s32 %s15, 1
      %s21 = ssub.s32 %s15, 2
      %s28 = sadd.s32 1, %s23
      %p29 = scmp.ge.s32.totalorder %s28, 2
      %s30 = scalar_select %p29, 0, %s28
      %s31 = sadd.s32 1, %s22
      %s32 = scalar_select %p29, %s31, %s22
      %p33 = scmp.ge.s32.totalorder %s32, 1
      %s34 = scalar_select %p33, 0, %s32
      %s35 = ssub.s32 %s22, %s34
      %p36 = scmp.eq.s32.totalorder %s35, 0
      %s38 = sadd.s32 %s37, 1
      %s39 = scalar_select %p36, %s37, %s38
      %p42 = pneg %p36
      %p43 = scmp.eq.s32.totalorder %s15, 1
      %p44 = por %p42, %p43
      %p45 = scmp.ne.s32.totalorder %s37, %s40
      %p46 = scmp.eq.s32.totalorder %s15, 0
      %p47 = por %p45, %p46
      %p48 = scmp.ne.s32.totalorder %s37, %s40
      %p49 = scmp.eq.s32.totalorder %s20, 1
      %p50 = por %p48, %p49
      %p51 = scmp.ne.s32.totalorder %s40, %s41
      %p52 = scmp.eq.s32.totalorder %s20, 0
      %p53 = por %p51, %p52
      %p54 = scmp.ne.s32.totalorder %s40, %s41
      %p55 = scmp.eq.s32.totalorder %s21, 1
      %p56 = por %p54, %p55
      %p58 = scmp.ne.s32.totalorder %s41, %s57
      %p59 = scmp.eq.s32.totalorder %s21, 0
      %p60 = por %p58, %p59
      %s61 = ssub.s32 %s23, %s30
      %p62 = scmp.eq.s32.totalorder %s61, 0
      %s64 = sadd.s32 %s63, 1
      %s65 = scalar_select %p62, %s63, %s64
      %p68 = pneg %p62
      %p69 = scmp.eq.s32.totalorder %s15, 1
      %p70 = por %p68, %p69
      %p71 = scmp.ne.s32.totalorder %s63, %s66
      %p72 = scmp.eq.s32.totalorder %s15, 0
      %p73 = por %p71, %p72
      %p74 = scmp.ne.s32.totalorder %s63, %s66
      %p75 = scmp.eq.s32.totalorder %s20, 1
      %p76 = por %p74, %p75
      %p77 = scmp.ne.s32.totalorder %s66, %s67
      %p78 = scmp.eq.s32.totalorder %s20, 0
      %p79 = por %p77, %p78
      %p80 = scmp.ne.s32.totalorder %s66, %s67
      %p81 = scmp.eq.s32.totalorder %s21, 1
      %p82 = por %p80, %p81
      %p84 = scmp.ne.s32.totalorder %s67, %s83
      %p85 = scmp.eq.s32.totalorder %s21, 0
      %p86 = por %p84, %p85
      %s87 = ssub.s32 %s22, %s34
      %s88 = ssub.s32 %s23, %s30
      %s89 = sor.u32 %s87, %s88
      %p90 = scmp.eq.s32.totalorder %s89, 0
      %s92 = sadd.s32 %s91, 1
      %s93 = scalar_select %p90, %s91, %s92
      %p96 = pneg %p90
      %p97 = scmp.eq.s32.totalorder %s15, 1
      %p98 = por %p96, %p97
      %p99 = scmp.ne.s32.totalorder %s91, %s94
      %p100 = scmp.eq.s32.totalorder %s15, 0
      %p101 = por %p99, %p100
      %p102 = scmp.ne.s32.totalorder %s91, %s94
      %p103 = scmp.eq.s32.totalorder %s20, 1
      %p104 = por %p102, %p103
      %p105 = scmp.ne.s32.totalorder %s94, %s95
      %p106 = scmp.eq.s32.totalorder %s20, 0
      %p107 = por %p105, %p106
      %p108 = scmp.ne.s32.totalorder %s94, %s95
      %p109 = scmp.eq.s32.totalorder %s21, 1
      %p110 = por %p108, %p109
      %p112 = scmp.ne.s32.totalorder %s95, %s111
      %p113 = scmp.eq.s32.totalorder %s21, 0
      %p114 = por %p112, %p113
      %p115 = scmp.le.s32.totalorder 1, %s15
      %p116 = scmp.lt.s32.totalorder %s15, 3
      %p117 = pnand %p115, %p116
      %p118 = pneg %p117
      // Predicated region
      $region9: #{tpu_custom_call.1} parent=5 // pred_check
        _
      $region10: #{tpu_custom_call.1} parent=5 // pred_check_branch
        %120 = sbr.rel (%p117) target = $region12
      $region11: #{tpu_custom_call.1} parent=5 // pred_region
        %s121 = ssub.s32 %s15, 1
        // Predicated region
        $region13: #{tpu_custom_call.1} parent=11 // pred_check
          %p122 = pneg %p53
        $region14: #{tpu_custom_call.1} parent=11 // pred_check_branch
          %124 = sbr.rel (%p122) target = $region16
        $region15: #{tpu_custom_call.1} parent=11 // pred_region
          %s126 = ssub.s32 64, 64
          %127 = vsyncadd [#allocation3], %s126
          %s128 = smul.addr %s24, 2
          %s129 = smul.addr %s128, 32
          %s130 = scalar_lea.hbm %s0, %s129
          %s132 = sshll.u32 [#allocation2], 4
          %s133 = int_to_ptr.vmem [resolvable:$true] %s132
          %135 = dma.hbm_to_vmem [thread:$0]  %s130, 64, %s133, [#allocation3]
        $region16: #{tpu_custom_call.1} parent=11 // pred_fallthru
          _
      $region12: #{tpu_custom_call.1} parent=5 // pred_fallthru
        _
      %p136 = scmp.lt.s32.totalorder %s15, 2
      // Predicated region
      $region17: #{tpu_custom_call.1} parent=5 // pred_check
        %p137 = pneg %p136
      $region18: #{tpu_custom_call.1} parent=5 // pred_check_branch
        %139 = sbr.rel (%p137) target = $region20
      $region19: #{tpu_custom_call.1} parent=5 // pred_region
        // Predicated region
        $region21: #{tpu_custom_call.1} parent=19 // pred_check
          %p140 = pneg %p73
        $region22: #{tpu_custom_call.1} parent=19 // pred_check_branch
          %142 = sbr.rel (%p140) target = $region24
        $region23: #{tpu_custom_call.1} parent=19 // pred_region
          %s143 = sand.u32 %s63, 1
          %s144 = scalar_lea.sflag [#allocation6], %s143
          %s145 = sand.u32 %s63, 1
          %s146 = smul.addr %s145, 256
          %s147 = scalar_lea.vmem [#allocation5], %s146
          %s149 = ssub.s32 4096, 4096
          %150 = vsyncadd %s144, %s149
          %s151 = smul.addr %s23, 128
          %s152 = scalar_lea.hbm %s1, %s151
          %s153 = sshll.u32 %s147, 4
          %s154 = int_to_ptr.vmem [resolvable:$true] %s153
          %159 = dma.hbm_to_vmem [thread:$0]  %s152, 4096, %s154, %s144, 256, 128, 8
        $region24: #{tpu_custom_call.1} parent=19 // pred_fallthru
          _
      $region20: #{tpu_custom_call.1} parent=5 // pred_fallthru
        _
      %p160 = scmp.le.s32.totalorder 1, %s15
      %p161 = scmp.lt.s32.totalorder %s15, 3
      %p162 = pnand %p160, %p161
      %p163 = pneg %p162
      // Predicated region
      $region25: #{tpu_custom_call.1} parent=5 // pred_check
        _
      $region26: #{tpu_custom_call.1} parent=5 // pred_check_branch
        %165 = sbr.rel (%p162) target = $region28
      $region27: #{tpu_custom_call.1} parent=5 // pred_region
        %s166 = ssub.s32 %s15, 1
        // Predicated region
        $region29: #{tpu_custom_call.1} parent=27 // pred_check
          %p167 = pneg %p53
        $region30: #{tpu_custom_call.1} parent=27 // pred_check_branch
          %169 = sbr.rel (%p167) target = $region32
        $region31: #{tpu_custom_call.1} parent=27 // pred_region
          %170 = dma.done [#allocation3], 64
        $region32: #{tpu_custom_call.1} parent=27 // pred_fallthru
          _
        %s171 = sand.u32 %s66, 1
        %s172 = scalar_lea.sflag [#allocation6], %s171
        %s173 = sand.u32 %s66, 1
        %s174 = smul.addr %s173, 256
        %s175 = scalar_lea.vmem [#allocation5], %s174
        // Predicated region
        $region33: #{tpu_custom_call.1} parent=27 // pred_check
          %p176 = pneg %p79
        $region34: #{tpu_custom_call.1} parent=27 // pred_check_branch
          %178 = sbr.rel (%p176) target = $region36
        $region35: #{tpu_custom_call.1} parent=27 // pred_region
          %179 = dma.done %s172, 4096
        $region36: #{tpu_custom_call.1} parent=27 // pred_fallthru
          _
        %p180 = pneg %p53
        %p181 = pneg %p50
        %s182 = sand.u32 %s66, 1
        %s183 = scalar_lea.sflag [#allocation6], %s182
        %s184 = sand.u32 %s66, 1
        %s185 = smul.addr %s184, 256
        %s186 = scalar_lea.vmem [#allocation5], %s185
        %p187 = pneg %p79
        %p188 = pneg %p76
        %p189 = pneg %p107
        %p190 = pneg %p104
        %s191 = sand.u32 %s94, 1
        %s192 = scalar_lea.sflag [#allocation4], %s191
        %s193 = sand.u32 %s94, 1
        %s194 = smul.addr %s193, 2
        %s195 = scalar_lea.vmem [#allocation7], %s194
        %v196 = vld [vmem:[#allocation2] sm:$0xf]
        %v197 = vld [vmem:[%s175] sm:$0xff]
        %v198 = vld [vmem:[%s175 + $0x8] sm:$0xff]
        %v199 = vld [vmem:[%s175 + $0x10] sm:$0xff]
        %v200 = vld [vmem:[%s175 + $0x18] sm:$0xff]
        %v201 = vld [vmem:[%s175 + $0x20] sm:$0xff]
        %v202 = vld [vmem:[%s175 + $0x28] sm:$0xff]
        %v203 = vld [vmem:[%s175 + $0x30] sm:$0xff]
        %v204 = vld [vmem:[%s175 + $0x38] sm:$0xff]
        %v205 = vld [vmem:[%s175 + $0x40] sm:$0xff]
        %v206 = vld [vmem:[%s175 + $0x48] sm:$0xff]
        %v207 = vld [vmem:[%s175 + $0x50] sm:$0xff]
        %v208 = vld [vmem:[%s175 + $0x58] sm:$0xff]
        %v209 = vld [vmem:[%s175 + $0x60] sm:$0xff]
        %v210 = vld [vmem:[%s175 + $0x68] sm:$0xff]
        %v211 = vld [vmem:[%s175 + $0x70] sm:$0xff]
        %v212 = vld [vmem:[%s175 + $0x78] sm:$0xff]
        %v213 = vld [vmem:[%s175 + $0x80] sm:$0xff]
        %v214 = vld [vmem:[%s175 + $0x88] sm:$0xff]
        %v215 = vld [vmem:[%s175 + $0x90] sm:$0xff]
        %v216 = vld [vmem:[%s175 + $0x98] sm:$0xff]
        %v217 = vld [vmem:[%s175 + $0xa0] sm:$0xff]
        %v218 = vld [vmem:[%s175 + $0xa8] sm:$0xff]
        %v219 = vld [vmem:[%s175 + $0xb0] sm:$0xff]
        %v220 = vld [vmem:[%s175 + $0xb8] sm:$0xff]
        %v221 = vld [vmem:[%s175 + $0xc0] sm:$0xff]
        %v222 = vld [vmem:[%s175 + $0xc8] sm:$0xff]
        %v223 = vld [vmem:[%s175 + $0xd0] sm:$0xff]
        %v224 = vld [vmem:[%s175 + $0xd8] sm:$0xff]
        %v225 = vld [vmem:[%s175 + $0xe0] sm:$0xff]
        %v226 = vld [vmem:[%s175 + $0xe8] sm:$0xff]
        %v227 = vld [vmem:[%s175 + $0xf0] sm:$0xff]
        %v228 = vld [vmem:[%s175 + $0xf8] sm:$0xff]
        %v231 = vunpack.c.l.s4 1983009808
        %v232 = vunpack.c.0.s8 %v231
        %v233 = vlaneseq
        %v234 = vshrl.u32 %v233, 7
        %v235 = vsub.s32 %v232, %v234
        %v236 = vrot.slane %v196, %v235
        %v237 = vcombine.high %v236, %v236
        %240 = vmatprep.subr.mxu0 0.0
        %241 = vmatpush1.msra.mxu0 %v212
        %242 = vmatprep.subr.mxu0 0.0
        %243 = vmatpush1.msra.mxu0 %v211
        %244 = vmatprep.subr.mxu0 0.0
        %245 = vmatpush1.msra.mxu0 %v210
        %246 = vmatprep.subr.mxu0 0.0
        %247 = vmatpush1.msra.mxu0 %v209
        %248 = vmatprep.subr.mxu0 0.0
        %249 = vmatpush1.msra.mxu0 %v208
        %250 = vmatprep.subr.mxu0 0.0
        %251 = vmatpush1.msra.mxu0 %v207
        %252 = vmatprep.subr.mxu0 0.0
        %253 = vmatpush1.msra.mxu0 %v206
        %254 = vmatprep.subr.mxu0 0.0
        %255 = vmatpush1.msra.mxu0 %v205
        %256 = vmatprep.subr.mxu0 0.0
        %257 = vmatpush1.msra.mxu0 %v204
        %258 = vmatprep.subr.mxu0 0.0
        %259 = vmatpush1.msra.mxu0 %v203
        %260 = vmatprep.subr.mxu0 0.0
        %261 = vmatpush1.msra.mxu0 %v202
        %262 = vmatprep.subr.mxu0 0.0
        %263 = vmatpush1.msra.mxu0 %v201
        %264 = vmatprep.subr.mxu0 0.0
        %265 = vmatpush1.msra.mxu0 %v200
        %266 = vmatprep.subr.mxu0 0.0
        %267 = vmatpush1.msra.mxu0 %v199
        %268 = vmatprep.subr.mxu0 0.0
        %269 = vmatpush1.msra.mxu0 %v198
        %270 = vmatprep.subr.mxu0 0.0
        %271 = vmatpush1.msra.mxu0 %v197
        %272 = vmatprep.subr.mxu0 0.0
        %273 = vmatpush2.msra.mxu0 %v228
        %274 = vmatprep.subr.mxu0 0.0
        %275 = vmatpush2.msra.mxu0 %v227
        %276 = vmatprep.subr.mxu0 0.0
        %277 = vmatpush2.msra.mxu0 %v226
        %278 = vmatprep.subr.mxu0 0.0
        %279 = vmatpush2.msra.mxu0 %v225
        %280 = vmatprep.subr.mxu0 0.0
        %281 = vmatpush2.msra.mxu0 %v224
        %282 = vmatprep.subr.mxu0 0.0
        %283 = vmatpush2.msra.mxu0 %v223
        %284 = vmatprep.subr.mxu0 0.0
        %285 = vmatpush2.msra.mxu0 %v222
        %286 = vmatprep.subr.mxu0 0.0
        %287 = vmatpush2.msra.mxu0 %v221
        %288 = vmatprep.subr.mxu0 0.0
        %289 = vmatpush2.msra.mxu0 %v220
        %290 = vmatprep.subr.mxu0 0.0
        %291 = vmatpush2.msra.mxu0 %v219
        %292 = vmatprep.subr.mxu0 0.0
        %293 = vmatpush2.msra.mxu0 %v218
        %294 = vmatprep.subr.mxu0 0.0
        %295 = vmatpush2.msra.mxu0 %v217
        %296 = vmatprep.subr.mxu0 0.0
        %297 = vmatpush2.msra.mxu0 %v216
        %298 = vmatprep.subr.mxu0 0.0
        %299 = vmatpush2.msra.mxu0 %v215
        %300 = vmatprep.subr.mxu0 0.0
        %301 = vmatpush2.msra.mxu0 %v214
        %302 = vmatprep.subr.mxu0 0.0
        %303 = vmatpush2.msra.mxu0 %v213
        %304 = vmatprep.mubr.f32.mxu0 %v237
        %305 = vmatmul.mubr.f32.gmra.mxu0 %v236
        %v306 = vpop.f32.mrf.mxu0
        %v307 = vadd.f32 0.0, %v306
        %v308 = vpop.f32.mrf.mxu0
        %309 = vdwg.mxu0
        %310 = vst [vmem:[%s195] sm:$0x3] %v307
        %s311 = sand.u32 %s94, 1
        %s312 = scalar_lea.sflag [#allocation4], %s311
        %s313 = sand.u32 %s94, 1
        %s314 = smul.addr %s313, 2
        %s315 = scalar_lea.vmem [#allocation7], %s314
        // Predicated region
        $region37: #{tpu_custom_call.1} parent=27 // pred_check
          %p316 = pneg %p104
        $region38: #{tpu_custom_call.1} parent=27 // pred_check_branch
          %318 = sbr.rel (%p316) target = $region40
        $region39: #{tpu_custom_call.1} parent=27 // pred_region
          %s320 = ssub.s32 32, 32
          %321 = vsyncadd %s312, %s320
          %s322 = smul.addr %s24, 2
          %s323 = sadd.s32 %s25, %s322
          %s324 = smul.addr %s323, 32
          %s325 = scalar_lea.hbm %s2, %s324
          %s327 = sshll.u32 %s315, 4
          %s328 = int_to_ptr.vmem [resolvable:$true] %s327
          %330 = dma.vmem_to_hbm [thread:$0]  %s328, 32, %s325, %s312
        $region40: #{tpu_custom_call.1} parent=27 // pred_fallthru
          _
      $region28: #{tpu_custom_call.1} parent=5 // pred_fallthru
        _
      %p331 = scmp.le.s32.totalorder 2, %s15
      // Predicated region
      $region41: #{tpu_custom_call.1} parent=5 // pred_check
        %p332 = pneg %p331
      $region42: #{tpu_custom_call.1} parent=5 // pred_check_branch
        %334 = sbr.rel (%p332) target = $region44
      $region43: #{tpu_custom_call.1} parent=5 // pred_region
        %s335 = ssub.s32 %s15, 2
        // Predicated region
        $region45: #{tpu_custom_call.1} parent=43 // pred_check
          %p336 = pneg %p110
        $region46: #{tpu_custom_call.1} parent=43 // pred_check_branch
          %338 = sbr.rel (%p336) target = $region48
        $region47: #{tpu_custom_call.1} parent=43 // pred_region
          %s339 = sand.u32 %s95, 1
          %s340 = scalar_lea.sflag [#allocation4], %s339
          %s341 = sand.u32 %s95, 1
          %s342 = smul.addr %s341, 2
          %s343 = scalar_lea.vmem [#allocation7], %s342
          %344 = dma.done %s340, 32
        $region48: #{tpu_custom_call.1} parent=43 // pred_fallthru
          _
      $region44: #{tpu_custom_call.1} parent=5 // pred_fallthru
        _
    $region6: #{tpu_custom_call.1} parent=1 // loop_footer
      %s19 = sadd.s32 1, %s15
    $region7: #{tpu_custom_call.1} parent=1 // loop_footer_branch
      %14 = sbr.rel target = $region3
    $region8: #{tpu_custom_call.1} parent=1 // loop_exit
      _
    %345 = vsyncpa [#allocation3], 1
    %s346 = scalar_lea.sflag [#allocation3], 1
    %347 = vsyncpa %s346, 1
    %348 = vsyncpa [#allocation6], 1
    %s349 = scalar_lea.sflag [#allocation6], 1
    %350 = vsyncpa %s349, 1
    %351 = vsyncpa [#allocation4], 1
    %s352 = scalar_lea.sflag [#allocation4], 1
    %353 = vsyncpa %s352, 1

</llo_original>
